<compile_context>
chip_gen: v6e
topology: v6e:2x2x1
jax: 0.10.0
libtpu: 0.0.40
codegen_flags: <defaults>
</compile_context>

<pallas_src>
import functools

import jax
import jax.numpy as jnp
from jax.experimental import pallas as pl
from jax.experimental.pallas import tpu as pltpu

LANES = 128
SUBLANES = 8
# 8192 x 128 f32 block = 4 MiB per input per pipeline buffer; 2 inputs x 2 buffers
# = 16 MiB, covered by the explicit vmem_limit_bytes below on all of v5e/v6e/v7x.
MAX_BLOCK_ROWS = 8192
# In-kernel sub-tile: keeps per-segment f32 temporaries at ~1 MiB each.
SUB_ROWS = 2048


def _round_up(x, m):
    return ((x + m - 1) // m) * m


def _dice_kernel(x_ref, t_ref, inter_ref, denom_ref, *, m_valid, block_rows,
                 needs_mask):
    # Grid: (batch, chunk). Output blocks are indexed by batch only, so they stay
    # resident in VMEM across the chunk axis and act as per-sample accumulators.
    c = pl.program_id(1)

    @pl.when(c == 0)
    def _init():
        inter_ref[...] = jnp.zeros_like(inter_ref)
        denom_ref[...] = jnp.zeros_like(denom_ref)

    def accumulate(masked):
        acc_i = jnp.zeros((SUBLANES, LANES), jnp.float32)
        acc_d = jnp.zeros((SUBLANES, LANES), jnp.float32)
        start = 0
        while start < block_rows:  # static Python loop over sub-tiles
            size = min(SUB_ROWS, block_rows - start)
            xs = x_ref[0, start:start + size, :].astype(jnp.float32)
            ts = t_ref[0, start:start + size, :].astype(jnp.float32)
            # Soft dice: probabilities, no thresholding. sigmoid(x) == 0.5*(tanh(x/2)+1)
            # exactly; tanh keeps the transcendental + divide on the EUP slot.
            ps = 0.5 * (jnp.tanh(0.5 * xs) + 1.0)
            if masked:
                # Only traced/run for the final chunk (see pl.when gate below): masks
                # the sub-128 lane tail and/or the block-rows overhang. jnp.where also
                # squashes NaN/Inf garbage from the un-DMA'd overhang region.
                row = jax.lax.broadcasted_iota(jnp.int32, (size, LANES), 0)
                lane = jax.lax.broadcasted_iota(jnp.int32, (size, LANES), 1)
                elem = (c * block_rows + start + row) * LANES + lane
                valid = elem < m_valid
                ps = jnp.where(valid, ps, 0.0)
                ts = jnp.where(valid, ts, 0.0)
            inter = ps * ts          # intersection contributions
            denom = ps + ts          # folded denominator (sum(p) + sum(t))
            # Fold (size, 128) -> (8, 128) per-lane partials with pure VPU adds
            # (reshape splits the sublane dim at the native (8,128) tile boundary).
            head = (size // SUBLANES) * SUBLANES
            if head:
                acc_i = acc_i + inter[:head].reshape(-1, SUBLANES, LANES).sum(axis=0)
                acc_d = acc_d + denom[:head].reshape(-1, SUBLANES, LANES).sum(axis=0)
            tail = size - head       # only when rows % 8 != 0 (single-chunk case)
            if tail:
                acc_i = acc_i.at[:tail].add(inter[head:])
                acc_d = acc_d.at[:tail].add(denom[head:])
            start += size
        inter_ref[0] += acc_i
        denom_ref[0] += acc_d

    if not needs_mask:
        accumulate(False)
    else:
        last = pl.num_programs(1) - 1

        @pl.when(c != last)          # unmasked fast path for all interior chunks
        def _fast():
            accumulate(False)

        @pl.when(c == last)          # only the final chunk can hold invalid data
        def _masked():
            accumulate(True)


def dice_loss_v1(inputs, targets, smooth=1.0):
    """Pallas TPU implementation of DiceLoss_V1.forward (soft dice, batch mean)."""
    n = inputs.shape[0]
    # Free reshapes (row-major). No dtype casts here: narrow dtypes (bf16 logits,
    # int8/bool targets) stream as-is and are upcast inside the kernel.
    x2 = inputs.reshape(n, -1)
    t2 = targets.reshape(n, -1)
    m = x2.shape[1]                  # elements per sample (C*H*W)

    rows = pl.cdiv(m, LANES)
    lane_pad = rows * LANES != m
    if lane_pad:
        # TODO(synk): a fully copy-free unaligned path (manual DMA from the raw
        # (n, m) view) would avoid this full HBM round-trip; only taken when
        # C*H*W % 128 != 0 (not the common segmentation case).
        rows = _round_up(rows, SUBLANES)
        pad = rows * LANES - m
        x2 = jnp.pad(x2, ((0, 0), (0, pad)))
        t2 = jnp.pad(t2, ((0, 0), (0, pad)))

    x3 = x2.reshape(n, rows, LANES)
    t3 = t2.reshape(n, rows, LANES)

    # Block second-minor dim: full extent (always legal) when it fits, else a
    # multiple-of-8 chunk with the overhang masked on the last chunk.
    block_rows = rows if rows <= MAX_BLOCK_ROWS else MAX_BLOCK_ROWS
    n_chunks = pl.cdiv(rows, block_rows)
    row_overhang = n_chunks * block_rows != rows
    # Keep in sync with the in-kernel masking: only the last chunk can contain
    # lane-tail padding or block-rows overhang.
    needs_mask = lane_pad or row_overhang
    assert n_chunks * block_rows * LANES < 2**31, "int32 element index would overflow"

    kernel = functools.partial(
        _dice_kernel, m_valid=m, block_rows=block_rows, needs_mask=needs_mask)

    # Scoped VMEM: 2 inputs x 2 pipeline buffers at native dtype + ~5 MiB of f32
    # sub-tile temporaries + the two tiny (8,128) accumulators. Set explicitly so
    # v5e's 16 MiB default does not throttle; capped below v7x's 64 MiB/TC.
    block_bytes = block_rows * LANES * (x3.dtype.itemsize + t3.dtype.itemsize)
    vmem_limit = min(2 * block_bytes + (16 << 20), 56 << 20)

    inter_p, denom_p = pl.pallas_call(
        kernel,
        out_shape=(
            jax.ShapeDtypeStruct((n, SUBLANES, LANES), jnp.float32),
            jax.ShapeDtypeStruct((n, SUBLANES, LANES), jnp.float32),
        ),
        grid_spec=pltpu.PrefetchScalarGridSpec(
            num_scalar_prefetch=0,
            grid=(n, n_chunks),
            in_specs=[
                pl.BlockSpec((1, block_rows, LANES), lambda b, c: (b, c, 0)),
                pl.BlockSpec((1, block_rows, LANES), lambda b, c: (b, c, 0)),
            ],
            out_specs=[
                pl.BlockSpec((1, SUBLANES, LANES), lambda b, c: (b, 0, 0)),
                pl.BlockSpec((1, SUBLANES, LANES), lambda b, c: (b, 0, 0)),
            ],
        ),
        compiler_params=pltpu.CompilerParams(
            # TODO(synk): for n == 1 on v7x, split the chunk axis across the two
            # TensorCores (extra grid axis + per-core accumulator slots, summed in
            # the wrapper) to use both cores.
            dimension_semantics=("parallel", "arbitrary"),
            vmem_limit_bytes=vmem_limit,
        ),
    )(x3, t3)

    # Tiny per-sample combine (a handful of scalars) done outside the kernel so
    # the `smooth` argument is honored exactly (PyTorch default: smooth=1).
    inter = jnp.sum(inter_p, axis=(1, 2))   # (n,)
    denom = jnp.sum(denom_p, axis=(1, 2))   # (n,)
    dice = (2.0 * inter + smooth) / (denom + smooth)
    return jnp.mean(1.0 - dice)


def _reference(inputs, targets, smooth=1.0):
    """Pure-JAX port of the PyTorch DiceLoss_V1.forward."""
    p = jax.nn.sigmoid(inputs.astype(jnp.float32))
    n = inputs.shape[0]
    total = 0.0
    for i in range(n):
        pi = p[i].reshape(-1)
        ti = targets[i].astype(jnp.float32).reshape(-1)
        intersection = jnp.sum(pi * ti)
        dice = (2.0 * intersection + smooth) / (jnp.sum(pi) + jnp.sum(ti) + smooth)
        total = total + (1.0 - dice)
    return total / n


if __name__ == "__main__":
    key = jax.random.PRNGKey(0)
    k1, k2 = jax.random.split(key)

    # Small NCHW logits / binary masks, consistent with a segmentation loss.
    shape = (2, 4, 16, 16)
    inputs = jax.random.normal(k1, shape, dtype=jnp.float32)
    targets = (jax.random.uniform(k2, shape) > 0.5).astype(jnp.float32)

    loss = dice_loss_v1(inputs, targets)  # smooth defaults to 1, as in the spec
    jax.block_until_ready(loss)

    ref = _reference(inputs, targets)
    assert jnp.allclose(loss, ref, rtol=1e-5, atol=1e-5), (loss, ref)

    print("KERNEL_OK")
</pallas_src>

<mosaic_0001>
module attributes {stable_mosaic.version = 11 : i64} {
  func.func @_dice_kernel(%arg0: i32, %arg1: i32, %arg2: memref<1x8x128xf32, #tpu.memory_space<vmem>>, %arg3: memref<1x8x128xf32, #tpu.memory_space<vmem>>, %arg4: memref<1x8x128xf32, #tpu.memory_space<vmem>>, %arg5: memref<1x8x128xf32, #tpu.memory_space<vmem>>) attributes {dimension_semantics = [#tpu.dimension_semantics<parallel>, #tpu.dimension_semantics<arbitrary>], iteration_bounds = array<i64: 2, 1>, scalar_prefetch = 0 : i64, scratch_operands = 0 : i64, tpu.core_type = #tpu.core_type<tc>, window_params = [{transform_indices = @transform_0, window_bounds = array<i64: 1, 8, 128>}, {transform_indices = @transform_1, window_bounds = array<i64: 1, 8, 128>}, {transform_indices = @transform_2, window_bounds = array<i64: 1, 8, 128>}, {transform_indices = @transform_3, window_bounds = array<i64: 1, 8, 128>}]} {
    %c0_i32 = arith.constant 0 : i32
    %0 = arith.cmpi eq, %arg1, %c0_i32 : i32
    %1 = arith.extui %0 : i1 to i32
    %c0_i32_0 = arith.constant 0 : i32
    %2 = arith.cmpi ne, %1, %c0_i32_0 : i32
    scf.if %2 {
      %cst_24 = arith.constant 0.000000e+00 : f32
      %36 = vector.broadcast %cst_24 : f32 to vector<1x8x128xf32>
      %c0_25 = arith.constant 0 : index
      %c0_26 = arith.constant 0 : index
      %c0_27 = arith.constant 0 : index
      %37 = vector.load %arg4[%c0_25, %c0_26, %c0_27] : memref<1x8x128xf32, #tpu.memory_space<vmem>>, vector<1x8x128xf32>
      tpu.vector_store %arg4[%c0_25, %c0_26, %c0_27], %36 {strides = array<i32>} : memref<1x8x128xf32, #tpu.memory_space<vmem>>, vector<1x8x128xf32>,
      %cst_28 = arith.constant 0.000000e+00 : f32
      %38 = vector.broadcast %cst_28 : f32 to vector<1x8x128xf32>
      %c0_29 = arith.constant 0 : index
      %c0_30 = arith.constant 0 : index
      %c0_31 = arith.constant 0 : index
      %39 = vector.load %arg5[%c0_29, %c0_30, %c0_31] : memref<1x8x128xf32, #tpu.memory_space<vmem>>, vector<1x8x128xf32>
      tpu.vector_store %arg5[%c0_29, %c0_30, %c0_31], %38 {strides = array<i32>} : memref<1x8x128xf32, #tpu.memory_space<vmem>>, vector<1x8x128xf32>,
    } else {
    }
    %cst = arith.constant 0.000000e+00 : f32
    %3 = vector.broadcast %cst : f32 to vector<8x128xf32>
    %cst_1 = arith.constant 0.000000e+00 : f32
    %4 = vector.broadcast %cst_1 : f32 to vector<8x128xf32>
    %c0 = arith.constant 0 : index
    %c0_2 = arith.constant 0 : index
    %c0_3 = arith.constant 0 : index
    %5 = vector.load %arg2[%c0, %c0_2, %c0_3] : memref<1x8x128xf32, #tpu.memory_space<vmem>>, vector<1x8x128xf32>
    %6 = vector.shape_cast %5 : vector<1x8x128xf32> to vector<8x128xf32>
    %c0_4 = arith.constant 0 : index
    %c0_5 = arith.constant 0 : index
    %c0_6 = arith.constant 0 : index
    %7 = vector.load %arg3[%c0_4, %c0_5, %c0_6] : memref<1x8x128xf32, #tpu.memory_space<vmem>>, vector<1x8x128xf32>
    %8 = vector.shape_cast %7 : vector<1x8x128xf32> to vector<8x128xf32>
    %cst_7 = arith.constant 5.000000e-01 : f32
    %9 = vector.broadcast %cst_7 : f32 to vector<8x128xf32>
    %10 = arith.mulf %9, %6 : vector<8x128xf32>
    %11 = math.tanh %10 : vector<8x128xf32>
    %cst_8 = arith.constant 1.000000e+00 : f32
    %12 = vector.broadcast %cst_8 : f32 to vector<8x128xf32>
    %13 = arith.addf %11, %12 : vector<8x128xf32>
    %cst_9 = arith.constant 5.000000e-01 : f32
    %14 = vector.broadcast %cst_9 : f32 to vector<8x128xf32>
    %15 = arith.mulf %14, %13 : vector<8x128xf32>
    %16 = arith.mulf %15, %8 : vector<8x128xf32>
    %17 = arith.addf %15, %8 : vector<8x128xf32>
    %18 = vector.shape_cast %16 : vector<8x128xf32> to vector<1x8x128xf32>
    %cst_10 = arith.constant dense<0.000000e+00> : vector<8x128xf32>
    %19 = vector.multi_reduction <add>, %18, %cst_10 [0] : vector<1x8x128xf32> to vector<8x128xf32>
    %20 = arith.addf %3, %19 : vector<8x128xf32>
    %21 = vector.shape_cast %17 : vector<8x128xf32> to vector<1x8x128xf32>
    %cst_11 = arith.constant dense<0.000000e+00> : vector<8x128xf32>
    %22 = vector.multi_reduction <add>, %21, %cst_11 [0] : vector<1x8x128xf32> to vector<8x128xf32>
    %23 = arith.addf %4, %22 : vector<8x128xf32>
    %c0_12 = arith.constant 0 : index
    %c0_13 = arith.constant 0 : index
    %c0_14 = arith.constant 0 : index
    %24 = vector.load %arg4[%c0_12, %c0_13, %c0_14] : memref<1x8x128xf32, #tpu.memory_space<vmem>>, vector<1x8x128xf32>
    %25 = vector.shape_cast %24 : vector<1x8x128xf32> to vector<8x128xf32>
    %26 = arith.addf %25, %20 : vector<8x128xf32>
    %c0_15 = arith.constant 0 : index
    %c0_16 = arith.constant 0 : index
    %c0_17 = arith.constant 0 : index
    %27 = vector.load %arg4[%c0_15, %c0_16, %c0_17] : memref<1x8x128xf32, #tpu.memory_space<vmem>>, vector<1x8x128xf32>
    %28 = vector.shape_cast %27 : vector<1x8x128xf32> to vector<8x128xf32>
    %29 = vector.shape_cast %26 : vector<8x128xf32> to vector<1x8x128xf32>
    tpu.vector_store %arg4[%c0_15, %c0_16, %c0_17], %29 {strides = array<i32>} : memref<1x8x128xf32, #tpu.memory_space<vmem>>, vector<1x8x128xf32>,
    %c0_18 = arith.constant 0 : index
    %c0_19 = arith.constant 0 : index
    %c0_20 = arith.constant 0 : index
    %30 = vector.load %arg5[%c0_18, %c0_19, %c0_20] : memref<1x8x128xf32, #tpu.memory_space<vmem>>, vector<1x8x128xf32>
    %31 = vector.shape_cast %30 : vector<1x8x128xf32> to vector<8x128xf32>
    %32 = arith.addf %31, %23 : vector<8x128xf32>
    %c0_21 = arith.constant 0 : index
    %c0_22 = arith.constant 0 : index
    %c0_23 = arith.constant 0 : index
    %33 = vector.load %arg5[%c0_21, %c0_22, %c0_23] : memref<1x8x128xf32, #tpu.memory_space<vmem>>, vector<1x8x128xf32>
    %34 = vector.shape_cast %33 : vector<1x8x128xf32> to vector<8x128xf32>
    %35 = vector.shape_cast %32 : vector<8x128xf32> to vector<1x8x128xf32>
    tpu.vector_store %arg5[%c0_21, %c0_22, %c0_23], %35 {strides = array<i32>} : memref<1x8x128xf32, #tpu.memory_space<vmem>>, vector<1x8x128xf32>,
    return
  }
  func.func @transform_0(%arg0: i32, %arg1: i32) -> (i32, i32, i32) {
    %c0_i32 = arith.constant 0 : i32
    %c0_i32_0 = arith.constant 0 : i32
    return %arg0, %arg1, %c0_i32 : i32, i32, i32
  }
  func.func @transform_1(%arg0: i32, %arg1: i32) -> (i32, i32, i32) {
    %c0_i32 = arith.constant 0 : i32
    %c0_i32_0 = arith.constant 0 : i32
    return %arg0, %arg1, %c0_i32 : i32, i32, i32
  }
  func.func @transform_2(%arg0: i32, %arg1: i32) -> (i32, i32, i32) {
    %c0_i32 = arith.constant 0 : i32
    %c0_i32_0 = arith.constant 0 : i32
    %c0_i32_1 = arith.constant 0 : i32
    return %arg0, %c0_i32, %c0_i32_0 : i32, i32, i32
  }
  func.func @transform_3(%arg0: i32, %arg1: i32) -> (i32, i32, i32) {
    %c0_i32 = arith.constant 0 : i32
    %c0_i32_0 = arith.constant 0 : i32
    %c0_i32_1 = arith.constant 0 : i32
    return %arg0, %c0_i32, %c0_i32_0 : i32, i32, i32
  }
}

</mosaic_0001>

<llo_original>
// kernel: tpu_custom_call.1
$region0: #{tpu_custom_call.1}
  #allocation0 [shape = 'u32[]', space=smem, size = 0x4, offset = 0x4, fixed_abs, tag = 'smem constant byte address 0x4 - core index']
  #allocation1 [shape = 'u32[144,128]{1,0:T(1,128)}', space=vmem, size = 0x12000, scoped, tag = 'internal scratch']
  %s0 = inlined_call_operand.hbm [shape: f32[2,8,128], index: 0, kind: input, shape index: {}]
  %s1 = inlined_call_operand.hbm [shape: f32[2,8,128], index: 1, kind: input, shape index: {}]
  %s2 = inlined_call_operand.hbm [shape: f32[2,8,128], index: 2, kind: output, shape index: {0}]
  %s3 = inlined_call_operand.hbm [shape: f32[2,8,128], index: 3, kind: output, shape index: {1}]
  %4 = xla_tuple %s2, %s3
  %s5 = sld [smem:[#allocation0]]
  $region61: #{tpu_custom_call.1} parent=0
    _
  %s7 = ssub.s32 1, %s5
  %s8 = scalar_select 0, %s7, %s5
  $region1: #{tpu_custom_call.1} parent=0
    #allocation2 [shape = 'u8[8192]{0}', space=vmem, size = 0x2000, scoped, tag = 'input window, operand 0']
    #allocation3 [shape = 's32[2]{0}', space=sflag, size = 0x8, scoped, tag = 'scoped memory for tpu_custom_call.1']
    #allocation4 [shape = 's32[2]{0}', space=sflag, size = 0x8, scoped, tag = 'scoped memory for tpu_custom_call.1']
    #allocation5 [shape = 'u8[8192]{0}', space=vmem, size = 0x2000, scoped, tag = 'input window, operand 1']
    #allocation6 [shape = 's32[2]{0}', space=sflag, size = 0x8, scoped, tag = 'scoped memory for tpu_custom_call.1']
    #allocation7 [shape = 'u8[8192]{0}', space=vmem, size = 0x2000, scoped, tag = 'output window, operand 0']
    #allocation8 [shape = 'u8[8192]{0}', space=vmem, size = 0x2000, scoped, tag = 'output window, operand 1']
    #allocation9 [shape = 's32[2]{0}', space=sflag, size = 0x8, scoped, tag = 'scoped memory for tpu_custom_call.1']
    %9 = vsyncpa [#allocation3], 0
    %s10 = scalar_lea.sflag [#allocation3], 1
    %11 = vsyncpa %s10, 0
    %12 = vsyncpa [#allocation6], 0
    %s13 = scalar_lea.sflag [#allocation6], 1
    %14 = vsyncpa %s13, 0
    %15 = vsyncpa [#allocation4], 0
    %s16 = scalar_lea.sflag [#allocation4], 1
    %17 = vsyncpa %s16, 0
    %18 = vsyncpa [#allocation9], 0
    %s19 = scalar_lea.sflag [#allocation9], 1
    %20 = vsyncpa %s19, 0
    loop: start=0, step=1, limit=4
    $region2: #{tpu_custom_call.1} parent=1 // loop_pre_header
      _
    $region3: #{tpu_custom_call.1} parent=1 // loop_header
      %s22 = sphi 0, %s26
      %p23 = scmp.ge.s32.totalorder %s22, 4
      %s29 = sphi 0, %s41
      %s30 = sphi 0, %s37
      %s31 = sphi 0, %s29
      %s32 = sphi 0, %s30
      %s33 = sphi 0, %s31
      %s34 = sphi 0, %s32
      %s46 = sphi 0, %s48
      %s49 = sphi 0, %s46
      %s50 = sphi 0, %s49
      %s66 = sphi 0, %s50
      %s74 = sphi 0, %s76
      %s77 = sphi 0, %s74
      %s78 = sphi 0, %s77
      %s94 = sphi 0, %s78
      %s100 = sphi 0, %s102
      %s103 = sphi 0, %s100
      %s104 = sphi 0, %s103
      %s120 = sphi 0, %s104
      %s126 = sphi 0, %s128
      %s129 = sphi 0, %s126
      %s130 = sphi 0, %s129
      %s146 = sphi 0, %s130
    $region4: #{tpu_custom_call.1} parent=1 // loop_header_branch
      %25 = sbr.rel (%p23) target = $region8
    $region5: #{tpu_custom_call.1} parent=1 // loop_body
      %s27 = ssub.s32 %s22, 1
      %s28 = ssub.s32 %s22, 2
      %s35 = sadd.s32 1, %s30
      %p36 = scmp.ge.s32.totalorder %s35, 1
      %s37 = scalar_select %p36, 0, %s35
      %s38 = sadd.s32 1, %s29
      %s39 = scalar_select %p36, %s38, %s29
      %p40 = scmp.ge.s32.totalorder %s39, 2
      %s41 = scalar_select %p40, 0, %s39
      %s42 = ssub.s32 %s29, %s41
      %s43 = ssub.s32 %s30, %s37
      %s44 = sor.u32 %s42, %s43
      %p45 = scmp.eq.s32.totalorder %s44, 0
      %s47 = sadd.s32 %s46, 1
      %s48 = scalar_select %p45, %s46, %s47
      %p51 = pneg %p45
      %p52 = scmp.eq.s32.totalorder %s22, 1
      %p53 = por %p51, %p52
      %p54 = scmp.ne.s32.totalorder %s46, %s49
      %p55 = scmp.eq.s32.totalorder %s22, 0
      %p56 = por %p54, %p55
      %p57 = scmp.ne.s32.totalorder %s46, %s49
      %p58 = scmp.eq.s32.totalorder %s27, 1
      %p59 = por %p57, %p58
      %p60 = scmp.ne.s32.totalorder %s49, %s50
      %p61 = scmp.eq.s32.totalorder %s27, 0
      %p62 = por %p60, %p61
      %p63 = scmp.ne.s32.totalorder %s49, %s50
      %p64 = scmp.eq.s32.totalorder %s28, 1
      %p65 = por %p63, %p64
      %p67 = scmp.ne.s32.totalorder %s50, %s66
      %p68 = scmp.eq.s32.totalorder %s28, 0
      %p69 = por %p67, %p68
      %s70 = ssub.s32 %s29, %s41
      %s71 = ssub.s32 %s30, %s37
      %s72 = sor.u32 %s70, %s71
      %p73 = scmp.eq.s32.totalorder %s72, 0
      %s75 = sadd.s32 %s74, 1
      %s76 = scalar_select %p73, %s74, %s75
      %p79 = pneg %p73
      %p80 = scmp.eq.s32.totalorder %s22, 1
      %p81 = por %p79, %p80
      %p82 = scmp.ne.s32.totalorder %s74, %s77
      %p83 = scmp.eq.s32.totalorder %s22, 0
      %p84 = por %p82, %p83
      %p85 = scmp.ne.s32.totalorder %s74, %s77
      %p86 = scmp.eq.s32.totalorder %s27, 1
      %p87 = por %p85, %p86
      %p88 = scmp.ne.s32.totalorder %s77, %s78
      %p89 = scmp.eq.s32.totalorder %s27, 0
      %p90 = por %p88, %p89
      %p91 = scmp.ne.s32.totalorder %s77, %s78
      %p92 = scmp.eq.s32.totalorder %s28, 1
      %p93 = por %p91, %p92
      %p95 = scmp.ne.s32.totalorder %s78, %s94
      %p96 = scmp.eq.s32.totalorder %s28, 0
      %p97 = por %p95, %p96
      %s98 = ssub.s32 %s29, %s41
      %p99 = scmp.eq.s32.totalorder %s98, 0
      %s101 = sadd.s32 %s100, 1
      %s102 = scalar_select %p99, %s100, %s101
      %p105 = pneg %p99
      %p106 = scmp.eq.s32.totalorder %s22, 1
      %p107 = por %p105, %p106
      %p108 = scmp.ne.s32.totalorder %s100, %s103
      %p109 = scmp.eq.s32.totalorder %s22, 0
      %p110 = por %p108, %p109
      %p111 = scmp.ne.s32.totalorder %s100, %s103
      %p112 = scmp.eq.s32.totalorder %s27, 1
      %p113 = por %p111, %p112
      %p114 = scmp.ne.s32.totalorder %s103, %s104
      %p115 = scmp.eq.s32.totalorder %s27, 0
      %p116 = por %p114, %p115
      %p117 = scmp.ne.s32.totalorder %s103, %s104
      %p118 = scmp.eq.s32.totalorder %s28, 1
      %p119 = por %p117, %p118
      %p121 = scmp.ne.s32.totalorder %s104, %s120
      %p122 = scmp.eq.s32.totalorder %s28, 0
      %p123 = por %p121, %p122
      %s124 = ssub.s32 %s29, %s41
      %p125 = scmp.eq.s32.totalorder %s124, 0
      %s127 = sadd.s32 %s126, 1
      %s128 = scalar_select %p125, %s126, %s127
      %p131 = pneg %p125
      %p132 = scmp.eq.s32.totalorder %s22, 1
      %p133 = por %p131, %p132
      %p134 = scmp.ne.s32.totalorder %s126, %s129
      %p135 = scmp.eq.s32.totalorder %s22, 0
      %p136 = por %p134, %p135
      %p137 = scmp.ne.s32.totalorder %s126, %s129
      %p138 = scmp.eq.s32.totalorder %s27, 1
      %p139 = por %p137, %p138
      %p140 = scmp.ne.s32.totalorder %s129, %s130
      %p141 = scmp.eq.s32.totalorder %s27, 0
      %p142 = por %p140, %p141
      %p143 = scmp.ne.s32.totalorder %s129, %s130
      %p144 = scmp.eq.s32.totalorder %s28, 1
      %p145 = por %p143, %p144
      %p147 = scmp.ne.s32.totalorder %s130, %s146
      %p148 = scmp.eq.s32.totalorder %s28, 0
      %p149 = por %p147, %p148
      %p150 = scmp.le.s32.totalorder 1, %s22
      %p151 = scmp.lt.s32.totalorder %s22, 3
      %p152 = pnand %p150, %p151
      %p153 = pneg %p152
      // Predicated region
      $region9: #{tpu_custom_call.1} parent=5 // pred_check
        _
      $region10: #{tpu_custom_call.1} parent=5 // pred_check_branch
        %155 = sbr.rel (%p152) target = $region12
      $region11: #{tpu_custom_call.1} parent=5 // pred_region
        %s156 = ssub.s32 %s22, 1
      $region12: #{tpu_custom_call.1} parent=5 // pred_fallthru
        _
      %p157 = scmp.lt.s32.totalorder %s22, 2
      // Predicated region
      $region13: #{tpu_custom_call.1} parent=5 // pred_check
        %p158 = pneg %p157
      $region14: #{tpu_custom_call.1} parent=5 // pred_check_branch
        %160 = sbr.rel (%p158) target = $region16
      $region15: #{tpu_custom_call.1} parent=5 // pred_region
        // Predicated region
        $region17: #{tpu_custom_call.1} parent=15 // pred_check
          %p161 = pneg %p56
        $region18: #{tpu_custom_call.1} parent=15 // pred_check_branch
          %163 = sbr.rel (%p161) target = $region20
        $region19: #{tpu_custom_call.1} parent=15 // pred_region
          %s164 = sand.u32 %s46, 1
          %s165 = scalar_lea.sflag [#allocation3], %s164
          %s166 = sand.u32 %s46, 1
          %s167 = smul.addr %s166, 8
          %s168 = scalar_lea.vmem [#allocation2], %s167
          %s170 = ssub.s32 128, 128
          %171 = vsyncadd %s165, %s170
          %s172 = sadd.s32 %s30, %s29
          %s173 = smul.addr %s172, 128
          %s174 = scalar_lea.hbm %s0, %s173
          %s176 = sshll.u32 %s168, 4
          %s177 = int_to_ptr.vmem [resolvable:$true] %s176
          %179 = dma.hbm_to_vmem [thread:$0]  %s174, 128, %s177, %s165
        $region20: #{tpu_custom_call.1} parent=15 // pred_fallthru
          _
        // Predicated region
        $region21: #{tpu_custom_call.1} parent=15 // pred_check
          %p180 = pneg %p84
        $region22: #{tpu_custom_call.1} parent=15 // pred_check_branch
          %182 = sbr.rel (%p180) target = $region24
        $region23: #{tpu_custom_call.1} parent=15 // pred_region
          %s183 = sand.u32 %s74, 1
          %s184 = scalar_lea.sflag [#allocation6], %s183
          %s185 = sand.u32 %s74, 1
          %s186 = smul.addr %s185, 8
          %s187 = scalar_lea.vmem [#allocation5], %s186
          %s189 = ssub.s32 128, 128
          %190 = vsyncadd %s184, %s189
          %s191 = sadd.s32 %s30, %s29
          %s192 = smul.addr %s191, 128
          %s193 = scalar_lea.hbm %s1, %s192
          %s195 = sshll.u32 %s187, 4
          %s196 = int_to_ptr.vmem [resolvable:$true] %s195
          %198 = dma.hbm_to_vmem [thread:$0]  %s193, 128, %s196, %s184
        $region24: #{tpu_custom_call.1} parent=15 // pred_fallthru
          _
      $region16: #{tpu_custom_call.1} parent=5 // pred_fallthru
        _
      %p199 = scmp.le.s32.totalorder 1, %s22
      %p200 = scmp.lt.s32.totalorder %s22, 3
      %p201 = pnand %p199, %p200
      %p202 = pneg %p201
      // Predicated region
      $region25: #{tpu_custom_call.1} parent=5 // pred_check
        _
      $region26: #{tpu_custom_call.1} parent=5 // pred_check_branch
        %204 = sbr.rel (%p201) target = $region28
      $region27: #{tpu_custom_call.1} parent=5 // pred_region
        %s205 = ssub.s32 %s22, 1
        %s206 = sand.u32 %s49, 1
        %s207 = scalar_lea.sflag [#allocation3], %s206
        %s208 = sand.u32 %s49, 1
        %s209 = smul.addr %s208, 8
        %s210 = scalar_lea.vmem [#allocation2], %s209
        // Predicated region
        $region29: #{tpu_custom_call.1} parent=27 // pred_check
          %p211 = pneg %p62
        $region30: #{tpu_custom_call.1} parent=27 // pred_check_branch
          %213 = sbr.rel (%p211) target = $region32
        $region31: #{tpu_custom_call.1} parent=27 // pred_region
          %214 = dma.done %s207, 128
        $region32: #{tpu_custom_call.1} parent=27 // pred_fallthru
          _
        %s215 = sand.u32 %s77, 1
        %s216 = scalar_lea.sflag [#allocation6], %s215
        %s217 = sand.u32 %s77, 1
        %s218 = smul.addr %s217, 8
        %s219 = scalar_lea.vmem [#allocation5], %s218
        // Predicated region
        $region33: #{tpu_custom_call.1} parent=27 // pred_check
          %p220 = pneg %p90
        $region34: #{tpu_custom_call.1} parent=27 // pred_check_branch
          %222 = sbr.rel (%p220) target = $region36
        $region35: #{tpu_custom_call.1} parent=27 // pred_region
          %223 = dma.done %s216, 128
        $region36: #{tpu_custom_call.1} parent=27 // pred_fallthru
          _
        %s224 = sand.u32 %s49, 1
        %s225 = scalar_lea.sflag [#allocation3], %s224
        %s226 = sand.u32 %s49, 1
        %s227 = smul.addr %s226, 8
        %s228 = scalar_lea.vmem [#allocation2], %s227
        %p229 = pneg %p62
        %p230 = pneg %p59
        %s231 = sand.u32 %s77, 1
        %s232 = scalar_lea.sflag [#allocation6], %s231
        %s233 = sand.u32 %s77, 1
        %s234 = smul.addr %s233, 8
        %s235 = scalar_lea.vmem [#allocation5], %s234
        %p236 = pneg %p90
        %p237 = pneg %p87
        %p238 = pneg %p116
        %p239 = pneg %p113
        %s240 = sand.u32 %s103, 1
        %s241 = scalar_lea.sflag [#allocation4], %s240
        %s242 = sand.u32 %s103, 1
        %s243 = smul.addr %s242, 8
        %s244 = scalar_lea.vmem [#allocation7], %s243
        %p245 = pneg %p142
        %p246 = pneg %p139
        %s247 = sand.u32 %s129, 1
        %s248 = scalar_lea.sflag [#allocation9], %s247
        %s249 = sand.u32 %s129, 1
        %s250 = smul.addr %s249, 8
        %s251 = scalar_lea.vmem [#allocation8], %s250
        %p252 = scmp.eq.s32.totalorder %s32, 0
        // Predicated region
        $region37: #{tpu_custom_call.1} parent=27 // pred_check
          %p253 = pneg %p252
        $region38: #{tpu_custom_call.1} parent=27 // pred_check_branch
          %255 = sbr.rel (%p253) target = $region40
        $region39: #{tpu_custom_call.1} parent=27 // pred_region
          %256 = vst [vmem:[%s244] sm:$0xff] 0.0
          %257 = vst [vmem:[%s251] sm:$0xff] 0.0
        $region40: #{tpu_custom_call.1} parent=27 // pred_fallthru
          _
        %v258 = vld [vmem:[%s210] sm:$0xff]
        %v259 = vld [vmem:[%s219] sm:$0xff]
        %v260 = vmul.f32 %v258, 0.5
        %v261 = vtanh.pop %v260
        %v262 = vadd.f32 %v261, 1.0
        %v263 = vmul.f32 %v262, 0.5
        %v264 = vmul.f32 %v263, %v259
        %v265 = vadd.f32 %v263, %v259
        %v266 = vadd.f32 %v264, 0.0
        %v267 = vadd.f32 %v266, 0.0
        %v268 = vadd.f32 %v265, 0.0
        %v269 = vadd.f32 %v268, 0.0
        %v270 = vld [vmem:[%s244] sm:$0xff]
        %v271 = vadd.f32 %v270, %v267
        %272 = vst [vmem:[%s244] sm:$0xff] %v271
        %v273 = vld [vmem:[%s251] sm:$0xff]
        %v274 = vadd.f32 %v273, %v269
        %275 = vst [vmem:[%s251] sm:$0xff] %v274
        %s276 = sand.u32 %s103, 1
        %s277 = scalar_lea.sflag [#allocation4], %s276
        %s278 = sand.u32 %s103, 1
        %s279 = smul.addr %s278, 8
        %s280 = scalar_lea.vmem [#allocation7], %s279
        %s281 = sand.u32 %s129, 1
        %s282 = scalar_lea.sflag [#allocation9], %s281
        %s283 = sand.u32 %s129, 1
        %s284 = smul.addr %s283, 8
        %s285 = scalar_lea.vmem [#allocation8], %s284
        // Predicated region
        $region41: #{tpu_custom_call.1} parent=27 // pred_check
          %p286 = pneg %p113
        $region42: #{tpu_custom_call.1} parent=27 // pred_check_branch
          %288 = sbr.rel (%p286) target = $region44
        $region43: #{tpu_custom_call.1} parent=27 // pred_region
          %s290 = ssub.s32 128, 128
          %291 = vsyncadd %s277, %s290
          %s292 = smul.addr %s31, 128
          %s293 = scalar_lea.hbm %s2, %s292
          %s295 = sshll.u32 %s280, 4
          %s296 = int_to_ptr.vmem [resolvable:$true] %s295
          %298 = dma.vmem_to_hbm [thread:$0]  %s296, 128, %s293, %s277
        $region44: #{tpu_custom_call.1} parent=27 // pred_fallthru
          _
        // Predicated region
        $region45: #{tpu_custom_call.1} parent=27 // pred_check
          %p299 = pneg %p139
        $region46: #{tpu_custom_call.1} parent=27 // pred_check_branch
          %301 = sbr.rel (%p299) target = $region48
        $region47: #{tpu_custom_call.1} parent=27 // pred_region
          %s303 = ssub.s32 128, 128
          %304 = vsyncadd %s282, %s303
          %s305 = smul.addr %s31, 128
          %s306 = scalar_lea.hbm %s3, %s305
          %s308 = sshll.u32 %s285, 4
          %s309 = int_to_ptr.vmem [resolvable:$true] %s308
          %311 = dma.vmem_to_hbm [thread:$0]  %s309, 128, %s306, %s282
        $region48: #{tpu_custom_call.1} parent=27 // pred_fallthru
          _
      $region28: #{tpu_custom_call.1} parent=5 // pred_fallthru
        _
      %p312 = scmp.le.s32.totalorder 2, %s22
      // Predicated region
      $region49: #{tpu_custom_call.1} parent=5 // pred_check
        %p313 = pneg %p312
      $region50: #{tpu_custom_call.1} parent=5 // pred_check_branch
        %315 = sbr.rel (%p313) target = $region52
      $region51: #{tpu_custom_call.1} parent=5 // pred_region
        %s316 = ssub.s32 %s22, 2
        // Predicated region
        $region53: #{tpu_custom_call.1} parent=51 // pred_check
          %p317 = pneg %p119
        $region54: #{tpu_custom_call.1} parent=51 // pred_check_branch
          %319 = sbr.rel (%p317) target = $region56
        $region55: #{tpu_custom_call.1} parent=51 // pred_region
          %s320 = sand.u32 %s104, 1
          %s321 = scalar_lea.sflag [#allocation4], %s320
          %s322 = sand.u32 %s104, 1
          %s323 = smul.addr %s322, 8
          %s324 = scalar_lea.vmem [#allocation7], %s323
          %325 = dma.done %s321, 128
        $region56: #{tpu_custom_call.1} parent=51 // pred_fallthru
          _
        // Predicated region
        $region57: #{tpu_custom_call.1} parent=51 // pred_check
          %p326 = pneg %p145
        $region58: #{tpu_custom_call.1} parent=51 // pred_check_branch
          %328 = sbr.rel (%p326) target = $region60
        $region59: #{tpu_custom_call.1} parent=51 // pred_region
          %s329 = sand.u32 %s130, 1
          %s330 = scalar_lea.sflag [#allocation9], %s329
          %s331 = sand.u32 %s130, 1
          %s332 = smul.addr %s331, 8
          %s333 = scalar_lea.vmem [#allocation8], %s332
          %334 = dma.done %s330, 128
        $region60: #{tpu_custom_call.1} parent=51 // pred_fallthru
          _
      $region52: #{tpu_custom_call.1} parent=5 // pred_fallthru
        _
    $region6: #{tpu_custom_call.1} parent=1 // loop_footer
      %s26 = sadd.s32 1, %s22
    $region7: #{tpu_custom_call.1} parent=1 // loop_footer_branch
      %21 = sbr.rel target = $region3
    $region8: #{tpu_custom_call.1} parent=1 // loop_exit
      _
    %335 = vsyncpa [#allocation3], 1
    %s336 = scalar_lea.sflag [#allocation3], 1
    %337 = vsyncpa %s336, 1
    %338 = vsyncpa [#allocation6], 1
    %s339 = scalar_lea.sflag [#allocation6], 1
    %340 = vsyncpa %s339, 1
    %341 = vsyncpa [#allocation4], 1
    %s342 = scalar_lea.sflag [#allocation4], 1
    %343 = vsyncpa %s342, 1
    %344 = vsyncpa [#allocation9], 1
    %s345 = scalar_lea.sflag [#allocation9], 1
    %346 = vsyncpa %s345, 1

</llo_original>
